<compile_context>
chip_gen: v6e
topology: v6e:2x2x1
jax: 0.10.0
libtpu: 0.0.40
codegen_flags: <defaults>
</compile_context>

<pallas_src>
import functools
import math

import jax
import jax.numpy as jnp
from jax import lax
from jax.experimental import pallas as pl
from jax.experimental.pallas import tpu as pltpu

F32 = jnp.float32
BF16 = jnp.bfloat16

D_MODEL = 2048
NHEAD = 8
HEAD_DIM = D_MODEL // NHEAD
FFN_DIM = 2048
NUM_ENC = 4
NUM_DEC = 6
NUM_CLASSES = 2
LN_EPS = 1e-5


def _round_up(x, m):
    return (x + m - 1) // m * m


@functools.lru_cache(maxsize=None)
def _mxu_rows():
    """256-row M tiles on v6e/v7x (2x256^2 MXU); 128 elsewhere (v5e 4x128^2)."""
    try:
        kind = jax.devices()[0].device_kind.lower()
    except Exception:
        kind = ""
    return 256 if ("v6" in kind or "v7" in kind) else 128


def _div_tile(p, cap):
    """Largest multiple-of-128 tile <= cap that divides p (p itself if p <= cap)."""
    if p <= cap:
        return p
    t = cap - cap % 128
    while p % t:
        t -= 128
    return t


# ----------------------------------------------------------------------------
# Pallas kernel: tiled MXU matmul with fused epilogue
#   y = acc + bias (+ residual) (+ ReLU) (+ LayerNorm), stored only at the last K step.
# ----------------------------------------------------------------------------
def _mm_kernel(*refs, relu, has_res, has_ln):
    a_ref, b_ref, bias_ref = refs[0], refs[1], refs[2]
    i = 3
    res_ref = None
    g_ref = be_ref = None
    if has_res:
        res_ref = refs[i]
        i += 1
    if has_ln:
        g_ref, be_ref = refs[i], refs[i + 1]
        i += 2
    o_ref, acc_ref = refs[i], refs[i + 1]

    @pl.when(pl.program_id(2) == 0)
    def _():
        acc_ref[...] = jnp.zeros_like(acc_ref)

    acc_ref[...] += jnp.dot(a_ref[...], b_ref[...],
                            preferred_element_type=jnp.float32)

    @pl.when(pl.program_id(2) == pl.num_programs(2) - 1)
    def _():
        y = acc_ref[...] + bias_ref[...]
        if has_res:
            y = y + res_ref[...].astype(jnp.float32)
        if relu:
            y = jnp.maximum(y, 0.0)
        if has_ln:  # LayerNorm over the full-width output row (tn == Np == n_out)
            mean = jnp.mean(y, axis=-1, keepdims=True)
            yc = y - mean
            var = jnp.mean(yc * yc, axis=-1, keepdims=True)
            y = yc * lax.rsqrt(var + LN_EPS) * g_ref[...] + be_ref[...]
        o_ref[...] = y.astype(o_ref.dtype)


@functools.partial(jax.jit, static_argnames=("relu", "n_out", "out_dtype"))
def matmul_fused(a, b_p, bias, res=None, ln_g=None, ln_b=None, *,
                 relu=False, n_out, out_dtype=BF16):
    """a: (M, K).  b_p: (Kp, Np) bf16 pre-padded weight (BN scale pre-folded).
    bias: (Np,) f32.  res: optional (M, n_out) residual (requires n_out == Np).
    ln_g/ln_b: optional (n_out,) LayerNorm params fused in the epilogue
    (requires n_out == Np; uses a single full-width N block).
    Returns (M, n_out) with y = [LN](relu?(a @ b + bias [+ res]))."""
    has_res = res is not None
    has_ln = ln_g is not None

    M, K = a.shape
    Kp, Np = b_p.shape
    assert n_out <= Np
    if has_ln or has_res:
        assert n_out == Np, (n_out, Np)

    a = a.astype(BF16)
    if K != Kp:
        a = jnp.pad(a, ((0, 0), (0, Kp - K)))

    # --- M tiling: generation-aware big-M tiles, tiny padded-seq rows for small M ---
    if M <= 64:
        Mp = _round_up(max(M, 8), 8)
        tm = Mp
        small_m = True
    else:
        tm = _mxu_rows()
        if M < tm or (M % tm and M % 128 == 0):
            tm = 128
        Mp = _round_up(M, tm)
        small_m = False
    if Mp != M:
        a = jnp.pad(a, ((0, Mp - M), (0, 0)))

    # --- K / N tiling ---
    if small_m:
        # Weight-streaming regime: few, large grid steps; keep >= 2 N blocks so the
        # "parallel" j axis can split across v7x's 2 TCs (unless LN needs full rows).
        tk = _div_tile(Kp, 2048)
        if has_ln:
            tn = Np
        else:
            tn = _div_tile(Np, 2048)
            if Np // tn < 2 and Np > 256:
                tn = _div_tile(Np, Np // 2)
    else:
        tk = _div_tile(Kp, 512)
        tn = Np if has_ln else _div_tile(Np, 512)

    bias = bias.reshape(1, Np)
    grid = (Mp // tm, Np // tn, Kp // tk)
    a_spec = pl.BlockSpec((tm, tk), lambda i, j, k: (i, k))
    b_spec = pl.BlockSpec((tk, tn), lambda i, j, k: (k, j))
    v_spec = pl.BlockSpec((1, tn), lambda i, j, k: (0, j))
    o_spec = pl.BlockSpec((tm, tn), lambda i, j, k: (i, j))

    in_specs = [a_spec, b_spec, v_spec]
    args = [a, b_p, bias]
    if has_res:
        res = res.astype(BF16)
        if Mp != M:
            res = jnp.pad(res, ((0, Mp - M), (0, 0)))
        in_specs.append(o_spec)
        args.append(res)
    if has_ln:
        in_specs += [v_spec, v_spec]
        args += [ln_g.reshape(1, Np), ln_b.reshape(1, Np)]

    out_bytes = jnp.dtype(out_dtype).itemsize
    vmem_est = (2 * (tm * tk * 2 + tk * tn * 2 + tn * 4)      # double-buffered inputs
                + (2 * tm * tn * 2 if has_res else 0)
                + (2 * 2 * tn * 4 if has_ln else 0)
                + 2 * tm * tn * out_bytes                     # double-buffered output
                + tm * tn * 4)                                # f32 accumulator
    vmem_limit = int(max(24 << 20, min(48 << 20, vmem_est + (4 << 20))))

    flops = 2 * Mp * Np * Kp
    bytes_accessed = Mp * Kp * 2 + Kp * Np * 2 + Mp * Np * out_bytes
    if has_res:
        bytes_accessed += Mp * Np * 2

    kernel = functools.partial(_mm_kernel, relu=relu, has_res=has_res, has_ln=has_ln)
    # TODO(synk): pl.Buffered(3) weight streaming for small-M calls suggested by the
    # review; left at default double-buffering for portability.
    out = pl.pallas_call(
        kernel,
        out_shape=jax.ShapeDtypeStruct((Mp, Np), out_dtype),
        grid_spec=pltpu.PrefetchScalarGridSpec(
            num_scalar_prefetch=0,
            grid=grid,
            in_specs=in_specs,
            out_specs=o_spec,
            scratch_shapes=[pltpu.VMEM((tm, tn), jnp.float32)]),
        compiler_params=pltpu.CompilerParams(
            dimension_semantics=("parallel", "parallel", "arbitrary"),
            vmem_limit_bytes=vmem_limit),
        cost_estimate=pl.CostEstimate(flops=flops, transcendentals=0,
                                      bytes_accessed=int(bytes_accessed)),
    )(*args)
    if Mp != M:
        out = out[:M]
    if Np != n_out:
        out = out[:, :n_out]
    return out


# ----------------------------------------------------------------------------
# Pallas kernel: elementwise bias + ReLU epilogue (for the spatial convs)
# ----------------------------------------------------------------------------
def _bias_act_kernel(x_ref, b_ref, o_ref, *, relu):
    y = x_ref[...] + b_ref[...]
    if relu:
        y = jnp.maximum(y, 0.0)
    o_ref[...] = y.astype(o_ref.dtype)


@functools.partial(jax.jit, static_argnames=("relu",))
def bias_act(x, bias, *, relu=True):
    """x: (M, C) f32 conv output.  bias: (C,) f32.  Returns (M, C) bf16."""
    M, C = x.shape
    Mp = _round_up(max(M, 8), 8)
    if Mp != M:
        x = jnp.pad(x, ((0, Mp - M), (0, 0)))
    tm = next(c for c in (512, 256, 128, 64, 32, 16, 8) if Mp % c == 0)
    out = pl.pallas_call(
        functools.partial(_bias_act_kernel, relu=relu),
        out_shape=jax.ShapeDtypeStruct((Mp, C), BF16),
        grid_spec=pltpu.PrefetchScalarGridSpec(
            num_scalar_prefetch=0,
            grid=(Mp // tm,),
            in_specs=[pl.BlockSpec((tm, C), lambda i: (i, 0)),
                      pl.BlockSpec((1, C), lambda i: (0, 0))],
            out_specs=pl.BlockSpec((tm, C), lambda i: (i, 0))),
        compiler_params=pltpu.CompilerParams(dimension_semantics=("parallel",)),
    )(x, bias.reshape(1, C))
    return out[:M] if Mp != M else out


# ----------------------------------------------------------------------------
# Pallas kernel: standalone LayerNorm (only the encoder/decoder final norms)
# ----------------------------------------------------------------------------
def _layernorm_kernel(x_ref, g_ref, b_ref, o_ref):
    x = x_ref[...].astype(jnp.float32)
    mean = jnp.mean(x, axis=-1, keepdims=True)
    xc = x - mean
    var = jnp.mean(xc * xc, axis=-1, keepdims=True)
    y = xc * lax.rsqrt(var + LN_EPS) * g_ref[...] + b_ref[...]
    o_ref[...] = y.astype(o_ref.dtype)


@jax.jit
def layernorm(x, gamma, beta):
    R, C = x.shape
    Rp = _round_up(max(R, 8), 8)
    xp = x if Rp == R else jnp.pad(x, ((0, Rp - R), (0, 0)))
    out = pl.pallas_call(
        _layernorm_kernel,
        out_shape=jax.ShapeDtypeStruct((Rp, C), BF16),
        grid_spec=pltpu.PrefetchScalarGridSpec(
            num_scalar_prefetch=0,
            grid=(Rp // 8,),
            in_specs=[pl.BlockSpec((8, C), lambda i: (i, 0)),
                      pl.BlockSpec((1, C), lambda i: (0, 0)),
                      pl.BlockSpec((1, C), lambda i: (0, 0))],
            out_specs=pl.BlockSpec((8, C), lambda i: (i, 0))),
        compiler_params=pltpu.CompilerParams(dimension_semantics=("parallel",)),
    )(xp, gamma.reshape(1, C), beta.reshape(1, C))
    return out[:R] if Rp != R else out


# ----------------------------------------------------------------------------
# Convolutions
# ----------------------------------------------------------------------------
def conv1x1_fused(x, cbn, stride, *, relu, res=None):
    """1x1 conv (BN scale folded into weights) as a fused Pallas matmul;
    bias / residual / ReLU applied in the matmul epilogue."""
    if stride > 1:
        x = x[:, ::stride, ::stride, :]
    N, H, W, C = x.shape
    a = x.reshape(N * H * W, C)
    r = None if res is None else res.reshape(N * H * W, res.shape[-1])
    y = matmul_fused(a, cbn['w'], cbn['b'], res=r, relu=relu, n_out=cbn['cout'])
    return y.reshape(N, H, W, cbn['cout'])


def conv_spatial_fused(x, cbn, stride, pad, *, relu):
    """kh x kw (>1) conv: spatial tap gathering via lax.conv (BN scale pre-folded into
    the weights), then bias + ReLU in a Pallas elementwise epilogue.
    No im2col patch tensor is written to HBM.
    TODO(synk): a fully-Pallas halo-DMA conv (taps folded into the matmul K pipeline)
    would replace this lax.conv fallback."""
    y = lax.conv_general_dilated(
        x, cbn['w4'],
        window_strides=(stride, stride),
        padding=[(pad, pad), (pad, pad)],
        dimension_numbers=('NHWC', 'HWIO', 'NHWC'),
        preferred_element_type=jnp.float32)
    N, Ho, Wo, Co = y.shape
    y = bias_act(y.reshape(N * Ho * Wo, Co), cbn['b'], relu=relu)
    return y.reshape(N, Ho, Wo, Co)


def maxpool_3x3_s2(x):
    # TODO(synk): max-pool via lax.reduce_window (tiny op), not a Pallas kernel.
    return lax.reduce_window(x, jnp.array(-jnp.inf, dtype=x.dtype), lax.max,
                             (1, 3, 3, 1), (1, 2, 2, 1),
                             [(0, 0), (1, 1), (1, 1), (0, 0)])


# ----------------------------------------------------------------------------
# Deterministic parameter construction (weights pre-padded, bf16, BN scale folded)
# ----------------------------------------------------------------------------
class KeyGen:
    def __init__(self, seed):
        self._key = jax.random.PRNGKey(seed)
        self._i = 0

    def __call__(self):
        self._i += 1
        return jax.random.fold_in(self._key, self._i)


def _pad_kn(K, N):
    if K % 128 == 0:
        Kp = K
    elif K <= 128:
        Kp = _round_up(K, 8)
    else:
        Kp = _round_up(K, 128)
    return Kp, _round_up(N, 128)


def _pad_weight(w):
    K, N = w.shape
    Kp, Np = _pad_kn(K, N)
    return jnp.pad(w, ((0, Kp - K), (0, Np - N))).astype(BF16)


def _pad_vec(v, n):
    return jnp.pad(v, (0, n - v.shape[0])).astype(F32)


def conv_bn_params(kg, kh, kw, cin, cout, eps=1e-5):
    std = math.sqrt(2.0 / (kh * kw * cin))                    # He init
    w = jax.random.normal(kg(), (kh, kw, cin, cout), F32) * std
    gamma = 1.0 + 0.1 * jax.random.normal(kg(), (cout,), F32)
    beta = 0.05 * jax.random.normal(kg(), (cout,), F32)
    running_mean = jnp.zeros((cout,), F32)
    running_var = jnp.ones((cout,), F32)
    scale = gamma * lax.rsqrt(running_var + eps)              # eval-mode BN fold
    bias = beta - running_mean * scale
    w = w * scale                                             # scale folded into weights
    if kh == 1 and kw == 1:
        Kp, Np = _pad_kn(cin, cout)
        w2 = jnp.pad(w.reshape(cin, cout),
                     ((0, Kp - cin), (0, Np - cout))).astype(BF16)
        return {'w': w2, 'b': _pad_vec(bias, Np), 'cout': cout}
    return {'w4': w.astype(BF16), 'b': bias.astype(F32), 'cout': cout}


def ln_params(c):
    return jnp.ones((c,), F32), jnp.zeros((c,), F32)


def make_resnet50_params(kg):
    p = {'stem': conv_bn_params(kg, 7, 7, 3, 64)}
    layers = []
    in_ch = 64
    for planes, blocks, stride in [(64, 3, 1), (128, 4, 2), (256, 6, 2), (512, 3, 2)]:
        stage = []
        for b in range(blocks):
            s = stride if b == 0 else 1
            blk = {'stride': s,
                   'c1': conv_bn_params(kg, 1, 1, in_ch, planes),
                   'c2': conv_bn_params(kg, 3, 3, planes, planes),
                   'c3': conv_bn_params(kg, 1, 1, planes, planes * 4)}
            if b == 0:
                blk['cd'] = conv_bn_params(kg, 1, 1, in_ch, planes * 4)
            stage.append(blk)
            in_ch = planes * 4
        layers.append(stage)
    p['layers'] = layers
    return p


def _randn(kg, shape, std=0.02):
    return jax.random.normal(kg(), shape, F32) * std


def self_attn_params(kg):
    wq = _randn(kg, (D_MODEL, D_MODEL))
    wk = _randn(kg, (D_MODEL, D_MODEL))
    wv = _randn(kg, (D_MODEL, D_MODEL))
    wo = _randn(kg, (D_MODEL, D_MODEL))
    return {'w_qkv': _pad_weight(jnp.concatenate([wq, wk, wv], axis=1)),
            'b_qkv': jnp.zeros((3 * D_MODEL,), F32),
            'wo': _pad_weight(wo), 'bo': jnp.zeros((D_MODEL,), F32)}


def cross_attn_params(kg):
    wq = _randn(kg, (D_MODEL, D_MODEL))
    wk = _randn(kg, (D_MODEL, D_MODEL))
    wv = _randn(kg, (D_MODEL, D_MODEL))
    wo = _randn(kg, (D_MODEL, D_MODEL))
    return {'w_q': _pad_weight(wq), 'b_q': jnp.zeros((D_MODEL,), F32),
            'w_kv': _pad_weight(jnp.concatenate([wk, wv], axis=1)),
            'b_kv': jnp.zeros((2 * D_MODEL,), F32),
            'wo': _pad_weight(wo), 'bo': jnp.zeros((D_MODEL,), F32)}


def ffn_params(kg):
    return {'ffn_w1': _pad_weight(_randn(kg, (D_MODEL, FFN_DIM))),
            'ffn_b1': jnp.zeros((FFN_DIM,), F32),
            'ffn_w2': _pad_weight(_randn(kg, (FFN_DIM, D_MODEL))),
            'ffn_b2': jnp.zeros((D_MODEL,), F32)}


def make_transformer_params(kg):
    enc = []
    for _ in range(NUM_ENC):
        lyr = {'self_attn': self_attn_params(kg),
               'ln1': ln_params(D_MODEL), 'ln2': ln_params(D_MODEL)}
        lyr.update(ffn_params(kg))
        enc.append(lyr)
    dec = []
    for _ in range(NUM_DEC):
        lyr = {'self_attn': self_attn_params(kg), 'cross_attn': cross_attn_params(kg),
               'ln1': ln_params(D_MODEL), 'ln2': ln_params(D_MODEL),
               'ln3': ln_params(D_MODEL)}
        lyr.update(ffn_params(kg))
        dec.append(lyr)
    return {'enc': enc, 'dec': dec,
            'enc_norm': ln_params(D_MODEL), 'dec_norm': ln_params(D_MODEL)}


def make_m2tr_params(seed=0):
    kg = KeyGen(seed)
    return {
        'backbone': make_resnet50_params(kg),
        'transformer': make_transformer_params(kg),
        'fc_w': _pad_weight(_randn(kg, (D_MODEL, NUM_CLASSES))),
        'fc_b': _pad_vec(jnp.zeros((NUM_CLASSES,), F32), 128),
    }


# ----------------------------------------------------------------------------
# ResNet-50 forward (eval mode); bias/residual/ReLU fused into the conv matmuls
# ----------------------------------------------------------------------------
def bottleneck(x, blk):
    s = blk['stride']
    out = conv1x1_fused(x, blk['c1'], 1, relu=True)
    out = conv_spatial_fused(out, blk['c2'], s, 1, relu=True)
    idn = conv1x1_fused(x, blk['cd'], s, relu=False) if 'cd' in blk else x
    # conv3 + BN3 + residual-add + ReLU inside one fused matmul epilogue
    return conv1x1_fused(out, blk['c3'], 1, relu=True, res=idn)


def resnet50_forward(x, p):
    x = conv_spatial_fused(x, p['stem'], 2, 3, relu=True)
    x = maxpool_3x3_s2(x)
    for stage in p['layers']:
        for blk in stage:
            x = bottleneck(x, blk)
    # adaptive avg-pool to 1x1 + flatten; backbone.fc is Identity
    # TODO(synk): global average pool (tiny reduction) left in plain JAX.
    return jnp.mean(x.astype(F32), axis=(1, 2))          # (B, 2048) f32


# ----------------------------------------------------------------------------
# Transformer forward (eval mode; seq-first, batch N=1 folded away).
# Tokens are padded to Sp (multiple of 8); padded key rows are masked in attention,
# and rows stay independent so the real rows are unchanged.
# ----------------------------------------------------------------------------
def _attention_core(q, k, v, s_valid):
    # TODO(synk): tiny (Sp x Sp) per-head attention kept in plain JAX glue; the
    # heavy 2048-wide projections run in the fused Pallas matmul kernel.
    Sp, E = q.shape
    scale = 1.0 / math.sqrt(HEAD_DIM)
    qh = q.astype(F32).reshape(Sp, NHEAD, HEAD_DIM).transpose(1, 0, 2) * scale
    kh = k.astype(F32).reshape(Sp, NHEAD, HEAD_DIM).transpose(1, 0, 2)
    vh = v.astype(F32).reshape(Sp, NHEAD, HEAD_DIM).transpose(1, 0, 2)
    scores = jnp.einsum('hqd,hkd->hqk', qh, kh)
    mask = jnp.arange(Sp) < s_valid                          # mask padded key rows
    scores = jnp.where(mask[None, None, :], scores, -1e30)
    attn = jax.nn.softmax(scores, axis=-1)
    ctx = jnp.einsum('hqk,hkd->hqd', attn, vh)
    return ctx.transpose(1, 0, 2).reshape(Sp, E).astype(BF16)


def self_attention(x, p, s_valid, ln):
    qkv = matmul_fused(x, p['w_qkv'], p['b_qkv'], n_out=3 * D_MODEL)
    q = qkv[:, :D_MODEL]
    k = qkv[:, D_MODEL:2 * D_MODEL]
    v = qkv[:, 2 * D_MODEL:]
    ctx = _attention_core(q, k, v, s_valid)
    # out-projection: bias + residual(x) + LayerNorm fused in the matmul epilogue
    return matmul_fused(ctx, p['wo'], p['bo'], res=x, ln_g=ln[0], ln_b=ln[1],
                        n_out=D_MODEL)


def cross_attention(x, mem, p, s_valid, ln):
    q = matmul_fused(x, p['w_q'], p['b_q'], n_out=D_MODEL)
    kv = matmul_fused(mem, p['w_kv'], p['b_kv'], n_out=2 * D_MODEL)
    k = kv[:, :D_MODEL]
    v = kv[:, D_MODEL:]
    ctx = _attention_core(q, k, v, s_valid)
    return matmul_fused(ctx, p['wo'], p['bo'], res=x, ln_g=ln[0], ln_b=ln[1],
                        n_out=D_MODEL)


def _ffn(x, p, ln):
    h = matmul_fused(x, p['ffn_w1'], p['ffn_b1'], relu=True, n_out=FFN_DIM)
    # linear2 + bias + residual(x) + LayerNorm fused in the matmul epilogue
    return matmul_fused(h, p['ffn_w2'], p['ffn_b2'], res=x, ln_g=ln[0], ln_b=ln[1],
                        n_out=D_MODEL)


def encoder_layer(x, p, s_valid):
    x = self_attention(x, p['self_attn'], s_valid, p['ln1'])
    x = _ffn(x, p, p['ln2'])
    return x


def decoder_layer(x, mem, p, s_valid):
    x = self_attention(x, p['self_attn'], s_valid, p['ln1'])
    x = cross_attention(x, mem, p['cross_attn'], s_valid, p['ln2'])
    x = _ffn(x, p, p['ln3'])
    return x


def transformer_forward(src, p, s_valid):
    mem = src
    for lyr in p['enc']:
        mem = encoder_layer(mem, lyr, s_valid)
    mem = layernorm(mem, *p['enc_norm'])
    out = src
    for lyr in p['dec']:
        out = decoder_layer(out, mem, lyr, s_valid)
    out = layernorm(out, *p['dec_norm'])
    return out


# ----------------------------------------------------------------------------
# M2TR forward
# ----------------------------------------------------------------------------
def m2tr_forward(x_nchw, params):
    x = jnp.transpose(x_nchw, (0, 2, 3, 1)).astype(BF16)       # NCHW -> NHWC, bf16
    feats = resnet50_forward(x, params['backbone'])             # (B, 2048) f32
    B = feats.shape[0]
    # features.unsqueeze(1) -> (B, 1, 2048); nn.Transformer default is seq-first,
    # so seq_len = B and batch = 1.  Pad seq to 8 rows; attention masks pad keys.
    Sp = _round_up(max(B, 8), 8)
    src = jnp.pad(feats, ((0, Sp - B), (0, 0))).astype(BF16)
    transformed = transformer_forward(src, params['transformer'], B)   # (Sp, 2048)
    # pooled = mean over dim=1 (size 1) == identity
    logits = matmul_fused(transformed, params['fc_w'], params['fc_b'],
                          n_out=NUM_CLASSES, out_dtype=F32)[:B]
    return logits                                               # (B, num_classes)


if __name__ == "__main__":
    key = jax.random.PRNGKey(0)
    x = jax.random.normal(key, (2, 3, 32, 32), F32)   # small NCHW image batch
    params = make_m2tr_params(seed=0)
    out = m2tr_forward(x, params)
    out = jax.block_until_ready(out)
    assert out.shape == (2, NUM_CLASSES), out.shape
    assert bool(jnp.all(jnp.isfinite(out)))
    print("KERNEL_OK")
</pallas_src>

<mosaic_0001>
module attributes {stable_mosaic.version = 11 : i64} {
  func.func @_bias_act_kernel(%arg0: i32, %arg1: memref<512x64xf32, #tpu.memory_space<vmem>>, %arg2: memref<1x64xf32, #tpu.memory_space<vmem>>, %arg3: memref<512x64xbf16, #tpu.memory_space<vmem>>) attributes {dimension_semantics = [#tpu.dimension_semantics<parallel>], iteration_bounds = array<i64: 1>, scalar_prefetch = 0 : i64, scratch_operands = 0 : i64, tpu.core_type = #tpu.core_type<tc>, window_params = [{transform_indices = @transform_0, window_bounds = array<i64: 512, 64>}, {pipeline_mode = #tpu.pipeline_mode<synchronous>, transform_indices = @transform_1, window_bounds = array<i64: 1, 64>}, {transform_indices = @transform_2, window_bounds = array<i64: 512, 64>}]} {
    %c0 = arith.constant 0 : index
    %c0_0 = arith.constant 0 : index
    %0 = vector.load %arg1[%c0, %c0_0] : memref<512x64xf32, #tpu.memory_space<vmem>>, vector<512x64xf32>
    %c0_1 = arith.constant 0 : index
    %c0_2 = arith.constant 0 : index
    %1 = vector.load %arg2[%c0_1, %c0_2] : memref<1x64xf32, #tpu.memory_space<vmem>>, vector<1x64xf32>
    %2 = vector.broadcast %1 : vector<1x64xf32> to vector<512x64xf32>
    %3 = arith.addf %0, %2 : vector<512x64xf32>
    %cst = arith.constant 0.000000e+00 : f32
    %4 = vector.broadcast %cst : f32 to vector<512x64xf32>
    %5 = arith.maximumf %3, %4 : vector<512x64xf32>
    %6 = arith.truncf %5 : vector<512x64xf32> to vector<512x64xbf16>
    %c0_3 = arith.constant 0 : index
    %c0_4 = arith.constant 0 : index
    %7 = vector.load %arg3[%c0_3, %c0_4] : memref<512x64xbf16, #tpu.memory_space<vmem>>, vector<512x64xbf16>
    tpu.vector_store %arg3[%c0_3, %c0_4], %6 {strides = array<i32>} : memref<512x64xbf16, #tpu.memory_space<vmem>>, vector<512x64xbf16>,
    return
  }
  func.func @transform_0(%arg0: i32) -> (i32, i32) {
    %c0_i32 = arith.constant 0 : i32
    %c0_i32_0 = arith.constant 0 : i32
    return %arg0, %c0_i32 : i32, i32
  }
  func.func @transform_1(%arg0: i32) -> (i32, i32) {
    %c0_i32 = arith.constant 0 : i32
    %c0_i32_0 = arith.constant 0 : i32
    %c0_i32_1 = arith.constant 0 : i32
    return %c0_i32, %c0_i32_0 : i32, i32
  }
  func.func @transform_2(%arg0: i32) -> (i32, i32) {
    %c0_i32 = arith.constant 0 : i32
    %c0_i32_0 = arith.constant 0 : i32
    return %arg0, %c0_i32 : i32, i32
  }
}

</mosaic_0001>

<llo_original>
// kernel: bias_act.1
$region0: #{bias_act.1}
  #allocation0 [shape = 'u32[]', space=smem, size = 0x4, offset = 0x4, fixed_abs, tag = 'smem constant byte address 0x4 - core index']
  #allocation1 [shape = 'u32[144,128]{1,0:T(1,128)}', space=vmem, size = 0x12000, scoped, tag = 'internal scratch']
  %s0 = inlined_call_operand.vmem [shape: f32[512,64], index: 0, kind: input, shape index: {}]
  %s1 = inlined_call_operand.vmem [shape: f32[1,64], index: 1, kind: input, shape index: {}]
  %s2 = inlined_call_operand.vmem [shape: bf16[512,64], index: 2, kind: output, shape index: {}]
  %s3 = sld [smem:[#allocation0]]
  $region18: #{bias_act.1} parent=0
    _
  %s5 = ssub.s32 1, %s3
  %s6 = scalar_select 0, %s5, %s3
  // Predicated region
  $region2: #{bias_act.1} parent=0 // pred_check
    _
  $region3: #{bias_act.1} parent=0 // pred_check_branch
    %8 = sbr.rel (0) target = $region5
  $region4: #{bias_act.1} parent=0 // pred_region
    _
  $region5: #{bias_act.1} parent=0 // pred_fallthru
    _
  // Predicated region
  $region6: #{bias_act.1} parent=0 // pred_check
    _
  $region7: #{bias_act.1} parent=0 // pred_check_branch
    %10 = sbr.rel (0) target = $region9
  $region8: #{bias_act.1} parent=0 // pred_region
    _
  $region9: #{bias_act.1} parent=0 // pred_fallthru
    _
  %v11 = vld [vmem:[%s0] sm:$0xff]
  %v12 = vld [vmem:[%s0 + $0x8] sm:$0xff]
  %v13 = vld [vmem:[%s0 + $0x10] sm:$0xff]
  %v14 = vld [vmem:[%s0 + $0x18] sm:$0xff]
  %v15 = vld [vmem:[%s0 + $0x20] sm:$0xff]
  %v16 = vld [vmem:[%s0 + $0x28] sm:$0xff]
  %v17 = vld [vmem:[%s0 + $0x30] sm:$0xff]
  %v18 = vld [vmem:[%s0 + $0x38] sm:$0xff]
  %v19 = vld [vmem:[%s0 + $0x40] sm:$0xff]
  %v20 = vld [vmem:[%s0 + $0x48] sm:$0xff]
  %v21 = vld [vmem:[%s0 + $0x50] sm:$0xff]
  %v22 = vld [vmem:[%s0 + $0x58] sm:$0xff]
  %v23 = vld [vmem:[%s0 + $0x60] sm:$0xff]
  %v24 = vld [vmem:[%s0 + $0x68] sm:$0xff]
  %v25 = vld [vmem:[%s0 + $0x70] sm:$0xff]
  %v26 = vld [vmem:[%s0 + $0x78] sm:$0xff]
  %v27 = vld [vmem:[%s0 + $0x80] sm:$0xff]
  %v28 = vld [vmem:[%s0 + $0x88] sm:$0xff]
  %v29 = vld [vmem:[%s0 + $0x90] sm:$0xff]
  %v30 = vld [vmem:[%s0 + $0x98] sm:$0xff]
  %v31 = vld [vmem:[%s0 + $0xa0] sm:$0xff]
  %v32 = vld [vmem:[%s0 + $0xa8] sm:$0xff]
  %v33 = vld [vmem:[%s0 + $0xb0] sm:$0xff]
  %v34 = vld [vmem:[%s0 + $0xb8] sm:$0xff]
  %v35 = vld [vmem:[%s0 + $0xc0] sm:$0xff]
  %v36 = vld [vmem:[%s0 + $0xc8] sm:$0xff]
  %v37 = vld [vmem:[%s0 + $0xd0] sm:$0xff]
  %v38 = vld [vmem:[%s0 + $0xd8] sm:$0xff]
  %v39 = vld [vmem:[%s0 + $0xe0] sm:$0xff]
  %v40 = vld [vmem:[%s0 + $0xe8] sm:$0xff]
  %v41 = vld [vmem:[%s0 + $0xf0] sm:$0xff]
  %v42 = vld [vmem:[%s0 + $0xf8] sm:$0xff]
  %v43 = vld [vmem:[%s0 + $0x100] sm:$0xff]
  %v44 = vld [vmem:[%s0 + $0x108] sm:$0xff]
  %v45 = vld [vmem:[%s0 + $0x110] sm:$0xff]
  %v46 = vld [vmem:[%s0 + $0x118] sm:$0xff]
  %v47 = vld [vmem:[%s0 + $0x120] sm:$0xff]
  %v48 = vld [vmem:[%s0 + $0x128] sm:$0xff]
  %v49 = vld [vmem:[%s0 + $0x130] sm:$0xff]
  %v50 = vld [vmem:[%s0 + $0x138] sm:$0xff]
  %v51 = vld [vmem:[%s0 + $0x140] sm:$0xff]
  %v52 = vld [vmem:[%s0 + $0x148] sm:$0xff]
  %v53 = vld [vmem:[%s0 + $0x150] sm:$0xff]
  %v54 = vld [vmem:[%s0 + $0x158] sm:$0xff]
  %v55 = vld [vmem:[%s0 + $0x160] sm:$0xff]
  %v56 = vld [vmem:[%s0 + $0x168] sm:$0xff]
  %v57 = vld [vmem:[%s0 + $0x170] sm:$0xff]
  %v58 = vld [vmem:[%s0 + $0x178] sm:$0xff]
  %v59 = vld [vmem:[%s0 + $0x180] sm:$0xff]
  %v60 = vld [vmem:[%s0 + $0x188] sm:$0xff]
  %v61 = vld [vmem:[%s0 + $0x190] sm:$0xff]
  %v62 = vld [vmem:[%s0 + $0x198] sm:$0xff]
  %v63 = vld [vmem:[%s0 + $0x1a0] sm:$0xff]
  %v64 = vld [vmem:[%s0 + $0x1a8] sm:$0xff]
  %v65 = vld [vmem:[%s0 + $0x1b0] sm:$0xff]
  %v66 = vld [vmem:[%s0 + $0x1b8] sm:$0xff]
  %v67 = vld [vmem:[%s0 + $0x1c0] sm:$0xff]
  %v68 = vld [vmem:[%s0 + $0x1c8] sm:$0xff]
  %v69 = vld [vmem:[%s0 + $0x1d0] sm:$0xff]
  %v70 = vld [vmem:[%s0 + $0x1d8] sm:$0xff]
  %v71 = vld [vmem:[%s0 + $0x1e0] sm:$0xff]
  %v72 = vld [vmem:[%s0 + $0x1e8] sm:$0xff]
  %v73 = vld [vmem:[%s0 + $0x1f0] sm:$0xff]
  %v74 = vld [vmem:[%s0 + $0x1f8] sm:$0xff]
  %v75 = vld [vmem:[%s1] sm:$0x1]
  %v77 = vlaneseq
  %v78 = vshrl.u32 %v77, 7
  %v79 = vsub.s32 0, %v78
  %v80 = vrot.slane %v75, %v79
  %v82 = vadd.f32 %v11, %v80
  %v83 = vadd.f32 %v12, %v80
  %v84 = vadd.f32 %v13, %v80
  %v85 = vadd.f32 %v14, %v80
  %v86 = vadd.f32 %v15, %v80
  %v87 = vadd.f32 %v16, %v80
  %v88 = vadd.f32 %v17, %v80
  %v89 = vadd.f32 %v18, %v80
  %v90 = vadd.f32 %v19, %v80
  %v91 = vadd.f32 %v20, %v80
  %v92 = vadd.f32 %v21, %v80
  %v93 = vadd.f32 %v22, %v80
  %v94 = vadd.f32 %v23, %v80
  %v95 = vadd.f32 %v24, %v80
  %v96 = vadd.f32 %v25, %v80
  %v97 = vadd.f32 %v26, %v80
  %v98 = vadd.f32 %v27, %v80
  %v99 = vadd.f32 %v28, %v80
  %v100 = vadd.f32 %v29, %v80
  %v101 = vadd.f32 %v30, %v80
  %v102 = vadd.f32 %v31, %v80
  %v103 = vadd.f32 %v32, %v80
  %v104 = vadd.f32 %v33, %v80
  %v105 = vadd.f32 %v34, %v80
  %v106 = vadd.f32 %v35, %v80
  %v107 = vadd.f32 %v36, %v80
  %v108 = vadd.f32 %v37, %v80
  %v109 = vadd.f32 %v38, %v80
  %v110 = vadd.f32 %v39, %v80
  %v111 = vadd.f32 %v40, %v80
  %v112 = vadd.f32 %v41, %v80
  %v113 = vadd.f32 %v42, %v80
  %v114 = vadd.f32 %v43, %v80
  %v115 = vadd.f32 %v44, %v80
  %v116 = vadd.f32 %v45, %v80
  %v117 = vadd.f32 %v46, %v80
  %v118 = vadd.f32 %v47, %v80
  %v119 = vadd.f32 %v48, %v80
  %v120 = vadd.f32 %v49, %v80
  %v121 = vadd.f32 %v50, %v80
  %v122 = vadd.f32 %v51, %v80
  %v123 = vadd.f32 %v52, %v80
  %v124 = vadd.f32 %v53, %v80
  %v125 = vadd.f32 %v54, %v80
  %v126 = vadd.f32 %v55, %v80
  %v127 = vadd.f32 %v56, %v80
  %v128 = vadd.f32 %v57, %v80
  %v129 = vadd.f32 %v58, %v80
  %v130 = vadd.f32 %v59, %v80
  %v131 = vadd.f32 %v60, %v80
  %v132 = vadd.f32 %v61, %v80
  %v133 = vadd.f32 %v62, %v80
  %v134 = vadd.f32 %v63, %v80
  %v135 = vadd.f32 %v64, %v80
  %v136 = vadd.f32 %v65, %v80
  %v137 = vadd.f32 %v66, %v80
  %v138 = vadd.f32 %v67, %v80
  %v139 = vadd.f32 %v68, %v80
  %v140 = vadd.f32 %v69, %v80
  %v141 = vadd.f32 %v70, %v80
  %v142 = vadd.f32 %v71, %v80
  %v143 = vadd.f32 %v72, %v80
  %v144 = vadd.f32 %v73, %v80
  %v145 = vadd.f32 %v74, %v80
  %v146 = vmax.f32 %v82, 0.0
  %v147 = vmax.f32 %v83, 0.0
  %v148 = vmax.f32 %v84, 0.0
  %v149 = vmax.f32 %v85, 0.0
  %v150 = vmax.f32 %v86, 0.0
  %v151 = vmax.f32 %v87, 0.0
  %v152 = vmax.f32 %v88, 0.0
  %v153 = vmax.f32 %v89, 0.0
  %v154 = vmax.f32 %v90, 0.0
  %v155 = vmax.f32 %v91, 0.0
  %v156 = vmax.f32 %v92, 0.0
  %v157 = vmax.f32 %v93, 0.0
  %v158 = vmax.f32 %v94, 0.0
  %v159 = vmax.f32 %v95, 0.0
  %v160 = vmax.f32 %v96, 0.0
  %v161 = vmax.f32 %v97, 0.0
  %v162 = vmax.f32 %v98, 0.0
  %v163 = vmax.f32 %v99, 0.0
  %v164 = vmax.f32 %v100, 0.0
  %v165 = vmax.f32 %v101, 0.0
  %v166 = vmax.f32 %v102, 0.0
  %v167 = vmax.f32 %v103, 0.0
  %v168 = vmax.f32 %v104, 0.0
  %v169 = vmax.f32 %v105, 0.0
  %v170 = vmax.f32 %v106, 0.0
  %v171 = vmax.f32 %v107, 0.0
  %v172 = vmax.f32 %v108, 0.0
  %v173 = vmax.f32 %v109, 0.0
  %v174 = vmax.f32 %v110, 0.0
  %v175 = vmax.f32 %v111, 0.0
  %v176 = vmax.f32 %v112, 0.0
  %v177 = vmax.f32 %v113, 0.0
  %v178 = vmax.f32 %v114, 0.0
  %v179 = vmax.f32 %v115, 0.0
  %v180 = vmax.f32 %v116, 0.0
  %v181 = vmax.f32 %v117, 0.0
  %v182 = vmax.f32 %v118, 0.0
  %v183 = vmax.f32 %v119, 0.0
  %v184 = vmax.f32 %v120, 0.0
  %v185 = vmax.f32 %v121, 0.0
  %v186 = vmax.f32 %v122, 0.0
  %v187 = vmax.f32 %v123, 0.0
  %v188 = vmax.f32 %v124, 0.0
  %v189 = vmax.f32 %v125, 0.0
  %v190 = vmax.f32 %v126, 0.0
  %v191 = vmax.f32 %v127, 0.0
  %v192 = vmax.f32 %v128, 0.0
  %v193 = vmax.f32 %v129, 0.0
  %v194 = vmax.f32 %v130, 0.0
  %v195 = vmax.f32 %v131, 0.0
  %v196 = vmax.f32 %v132, 0.0
  %v197 = vmax.f32 %v133, 0.0
  %v198 = vmax.f32 %v134, 0.0
  %v199 = vmax.f32 %v135, 0.0
  %v200 = vmax.f32 %v136, 0.0
  %v201 = vmax.f32 %v137, 0.0
  %v202 = vmax.f32 %v138, 0.0
  %v203 = vmax.f32 %v139, 0.0
  %v204 = vmax.f32 %v140, 0.0
  %v205 = vmax.f32 %v141, 0.0
  %v206 = vmax.f32 %v142, 0.0
  %v207 = vmax.f32 %v143, 0.0
  %v208 = vmax.f32 %v144, 0.0
  %v209 = vmax.f32 %v145, 0.0
  %v210 = vpack.c.bf16 %v147, %v146
  %v211 = vpack.c.bf16 %v149, %v148
  %v212 = vpack.c.bf16 %v151, %v150
  %v213 = vpack.c.bf16 %v153, %v152
  %v214 = vpack.c.bf16 %v155, %v154
  %v215 = vpack.c.bf16 %v157, %v156
  %v216 = vpack.c.bf16 %v159, %v158
  %v217 = vpack.c.bf16 %v161, %v160
  %v218 = vpack.c.bf16 %v163, %v162
  %v219 = vpack.c.bf16 %v165, %v164
  %v220 = vpack.c.bf16 %v167, %v166
  %v221 = vpack.c.bf16 %v169, %v168
  %v222 = vpack.c.bf16 %v171, %v170
  %v223 = vpack.c.bf16 %v173, %v172
  %v224 = vpack.c.bf16 %v175, %v174
  %v225 = vpack.c.bf16 %v177, %v176
  %v226 = vpack.c.bf16 %v179, %v178
  %v227 = vpack.c.bf16 %v181, %v180
  %v228 = vpack.c.bf16 %v183, %v182
  %v229 = vpack.c.bf16 %v185, %v184
  %v230 = vpack.c.bf16 %v187, %v186
  %v231 = vpack.c.bf16 %v189, %v188
  %v232 = vpack.c.bf16 %v191, %v190
  %v233 = vpack.c.bf16 %v193, %v192
  %v234 = vpack.c.bf16 %v195, %v194
  %v235 = vpack.c.bf16 %v197, %v196
  %v236 = vpack.c.bf16 %v199, %v198
  %v237 = vpack.c.bf16 %v201, %v200
  %v238 = vpack.c.bf16 %v203, %v202
  %v239 = vpack.c.bf16 %v205, %v204
  %v240 = vpack.c.bf16 %v207, %v206
  %v241 = vpack.c.bf16 %v209, %v208
  %v274 = vunpack.c.l.b16 %v210
  %v275 = vunpack.c.h.b16 %v210
  %v276 = vunpack.c.l.b16 %v211
  %v277 = vunpack.c.h.b16 %v211
  %v278 = vunpack.c.l.b16 %v212
  %v279 = vunpack.c.h.b16 %v212
  %v280 = vunpack.c.l.b16 %v213
  %v281 = vunpack.c.h.b16 %v213
  %v282 = vunpack.c.l.b16 %v214
  %v283 = vunpack.c.h.b16 %v214
  %v284 = vunpack.c.l.b16 %v215
  %v285 = vunpack.c.h.b16 %v215
  %v286 = vunpack.c.l.b16 %v216
  %v287 = vunpack.c.h.b16 %v216
  %v288 = vunpack.c.l.b16 %v217
  %v289 = vunpack.c.h.b16 %v217
  %v290 = vunpack.c.l.b16 %v218
  %v291 = vunpack.c.h.b16 %v218
  %v292 = vunpack.c.l.b16 %v219
  %v293 = vunpack.c.h.b16 %v219
  %v294 = vunpack.c.l.b16 %v220
  %v295 = vunpack.c.h.b16 %v220
  %v296 = vunpack.c.l.b16 %v221
  %v297 = vunpack.c.h.b16 %v221
  %v298 = vunpack.c.l.b16 %v222
  %v299 = vunpack.c.h.b16 %v222
  %v300 = vunpack.c.l.b16 %v223
  %v301 = vunpack.c.h.b16 %v223
  %v302 = vunpack.c.l.b16 %v224
  %v303 = vunpack.c.h.b16 %v224
  %v304 = vunpack.c.l.b16 %v225
  %v305 = vunpack.c.h.b16 %v225
  %v306 = vunpack.c.l.b16 %v226
  %v307 = vunpack.c.h.b16 %v226
  %v308 = vunpack.c.l.b16 %v227
  %v309 = vunpack.c.h.b16 %v227
  %v310 = vunpack.c.l.b16 %v228
  %v311 = vunpack.c.h.b16 %v228
  %v312 = vunpack.c.l.b16 %v229
  %v313 = vunpack.c.h.b16 %v229
  %v314 = vunpack.c.l.b16 %v230
  %v315 = vunpack.c.h.b16 %v230
  %v316 = vunpack.c.l.b16 %v231
  %v317 = vunpack.c.h.b16 %v231
  %v318 = vunpack.c.l.b16 %v232
  %v319 = vunpack.c.h.b16 %v232
  %v320 = vunpack.c.l.b16 %v233
  %v321 = vunpack.c.h.b16 %v233
  %v322 = vunpack.c.l.b16 %v234
  %v323 = vunpack.c.h.b16 %v234
  %v324 = vunpack.c.l.b16 %v235
  %v325 = vunpack.c.h.b16 %v235
  %v326 = vunpack.c.l.b16 %v236
  %v327 = vunpack.c.h.b16 %v236
  %v328 = vunpack.c.l.b16 %v237
  %v329 = vunpack.c.h.b16 %v237
  %v330 = vunpack.c.l.b16 %v238
  %v331 = vunpack.c.h.b16 %v238
  %v332 = vunpack.c.l.b16 %v239
  %v333 = vunpack.c.h.b16 %v239
  %v334 = vunpack.c.l.b16 %v240
  %v335 = vunpack.c.h.b16 %v240
  %v336 = vunpack.c.l.b16 %v241
  %v337 = vunpack.c.h.b16 %v241
  %v338 = vpack.c.b16 %v274, %v274
  %v339 = vpack.c.b16 %v275, %v275
  %v340 = vpack.c.b16 %v276, %v276
  %v341 = vpack.c.b16 %v277, %v277
  %v342 = vpack.c.b16 %v278, %v278
  %v343 = vpack.c.b16 %v279, %v279
  %v344 = vpack.c.b16 %v280, %v280
  %v345 = vpack.c.b16 %v281, %v281
  %v346 = vpack.c.b16 %v282, %v282
  %v347 = vpack.c.b16 %v283, %v283
  %v348 = vpack.c.b16 %v284, %v284
  %v349 = vpack.c.b16 %v285, %v285
  %v350 = vpack.c.b16 %v286, %v286
  %v351 = vpack.c.b16 %v287, %v287
  %v352 = vpack.c.b16 %v288, %v288
  %v353 = vpack.c.b16 %v289, %v289
  %v354 = vpack.c.b16 %v290, %v290
  %v355 = vpack.c.b16 %v291, %v291
  %v356 = vpack.c.b16 %v292, %v292
  %v357 = vpack.c.b16 %v293, %v293
  %v358 = vpack.c.b16 %v294, %v294
  %v359 = vpack.c.b16 %v295, %v295
  %v360 = vpack.c.b16 %v296, %v296
  %v361 = vpack.c.b16 %v297, %v297
  %v362 = vpack.c.b16 %v298, %v298
  %v363 = vpack.c.b16 %v299, %v299
  %v364 = vpack.c.b16 %v300, %v300
  %v365 = vpack.c.b16 %v301, %v301
  %v366 = vpack.c.b16 %v302, %v302
  %v367 = vpack.c.b16 %v303, %v303
  %v368 = vpack.c.b16 %v304, %v304
  %v369 = vpack.c.b16 %v305, %v305
  %v370 = vpack.c.b16 %v306, %v306
  %v371 = vpack.c.b16 %v307, %v307
  %v372 = vpack.c.b16 %v308, %v308
  %v373 = vpack.c.b16 %v309, %v309
  %v374 = vpack.c.b16 %v310, %v310
  %v375 = vpack.c.b16 %v311, %v311
  %v376 = vpack.c.b16 %v312, %v312
  %v377 = vpack.c.b16 %v313, %v313
  %v378 = vpack.c.b16 %v314, %v314
  %v379 = vpack.c.b16 %v315, %v315
  %v380 = vpack.c.b16 %v316, %v316
  %v381 = vpack.c.b16 %v317, %v317
  %v382 = vpack.c.b16 %v318, %v318
  %v383 = vpack.c.b16 %v319, %v319
  %v384 = vpack.c.b16 %v320, %v320
  %v385 = vpack.c.b16 %v321, %v321
  %v386 = vpack.c.b16 %v322, %v322
  %v387 = vpack.c.b16 %v323, %v323
  %v388 = vpack.c.b16 %v324, %v324
  %v389 = vpack.c.b16 %v325, %v325
  %v390 = vpack.c.b16 %v326, %v326
  %v391 = vpack.c.b16 %v327, %v327
  %v392 = vpack.c.b16 %v328, %v328
  %v393 = vpack.c.b16 %v329, %v329
  %v394 = vpack.c.b16 %v330, %v330
  %v395 = vpack.c.b16 %v331, %v331
  %v396 = vpack.c.b16 %v332, %v332
  %v397 = vpack.c.b16 %v333, %v333
  %v398 = vpack.c.b16 %v334, %v334
  %v399 = vpack.c.b16 %v335, %v335
  %v400 = vpack.c.b16 %v336, %v336
  %v401 = vpack.c.b16 %v337, %v337
  %vm466 = vcmask 519168
  %467 = vst.msk [vmem:[%s2] sm:$0xf] %vm466, %v338
  %468 = vst.msk [vmem:[%s2 + $0x4] sm:$0xf] %vm466, %v339
  %469 = vst.msk [vmem:[%s2 + $0x8] sm:$0xf] %vm466, %v340
  %470 = vst.msk [vmem:[%s2 + $0xc] sm:$0xf] %vm466, %v341
  %471 = vst.msk [vmem:[%s2 + $0x10] sm:$0xf] %vm466, %v342
  %472 = vst.msk [vmem:[%s2 + $0x14] sm:$0xf] %vm466, %v343
  %473 = vst.msk [vmem:[%s2 + $0x18] sm:$0xf] %vm466, %v344
  %474 = vst.msk [vmem:[%s2 + $0x1c] sm:$0xf] %vm466, %v345
  %475 = vst.msk [vmem:[%s2 + $0x20] sm:$0xf] %vm466, %v346
  %476 = vst.msk [vmem:[%s2 + $0x24] sm:$0xf] %vm466, %v347
  %477 = vst.msk [vmem:[%s2 + $0x28] sm:$0xf] %vm466, %v348
  %478 = vst.msk [vmem:[%s2 + $0x2c] sm:$0xf] %vm466, %v349
  %479 = vst.msk [vmem:[%s2 + $0x30] sm:$0xf] %vm466, %v350
  %480 = vst.msk [vmem:[%s2 + $0x34] sm:$0xf] %vm466, %v351
  %481 = vst.msk [vmem:[%s2 + $0x38] sm:$0xf] %vm466, %v352
  %482 = vst.msk [vmem:[%s2 + $0x3c] sm:$0xf] %vm466, %v353
  %483 = vst.msk [vmem:[%s2 + $0x40] sm:$0xf] %vm466, %v354
  %484 = vst.msk [vmem:[%s2 + $0x44] sm:$0xf] %vm466, %v355
  %485 = vst.msk [vmem:[%s2 + $0x48] sm:$0xf] %vm466, %v356
  %486 = vst.msk [vmem:[%s2 + $0x4c] sm:$0xf] %vm466, %v357
  %487 = vst.msk [vmem:[%s2 + $0x50] sm:$0xf] %vm466, %v358
  %488 = vst.msk [vmem:[%s2 + $0x54] sm:$0xf] %vm466, %v359
  %489 = vst.msk [vmem:[%s2 + $0x58] sm:$0xf] %vm466, %v360
  %490 = vst.msk [vmem:[%s2 + $0x5c] sm:$0xf] %vm466, %v361
  %491 = vst.msk [vmem:[%s2 + $0x60] sm:$0xf] %vm466, %v362
  %492 = vst.msk [vmem:[%s2 + $0x64] sm:$0xf] %vm466, %v363
  %493 = vst.msk [vmem:[%s2 + $0x68] sm:$0xf] %vm466, %v364
  %494 = vst.msk [vmem:[%s2 + $0x6c] sm:$0xf] %vm466, %v365
  %495 = vst.msk [vmem:[%s2 + $0x70] sm:$0xf] %vm466, %v366
  %496 = vst.msk [vmem:[%s2 + $0x74] sm:$0xf] %vm466, %v367
  %497 = vst.msk [vmem:[%s2 + $0x78] sm:$0xf] %vm466, %v368
  %498 = vst.msk [vmem:[%s2 + $0x7c] sm:$0xf] %vm466, %v369
  %499 = vst.msk [vmem:[%s2 + $0x80] sm:$0xf] %vm466, %v370
  %500 = vst.msk [vmem:[%s2 + $0x84] sm:$0xf] %vm466, %v371
  %501 = vst.msk [vmem:[%s2 + $0x88] sm:$0xf] %vm466, %v372
  %502 = vst.msk [vmem:[%s2 + $0x8c] sm:$0xf] %vm466, %v373
  %503 = vst.msk [vmem:[%s2 + $0x90] sm:$0xf] %vm466, %v374
  %504 = vst.msk [vmem:[%s2 + $0x94] sm:$0xf] %vm466, %v375
  %505 = vst.msk [vmem:[%s2 + $0x98] sm:$0xf] %vm466, %v376
  %506 = vst.msk [vmem:[%s2 + $0x9c] sm:$0xf] %vm466, %v377
  %507 = vst.msk [vmem:[%s2 + $0xa0] sm:$0xf] %vm466, %v378
  %508 = vst.msk [vmem:[%s2 + $0xa4] sm:$0xf] %vm466, %v379
  %509 = vst.msk [vmem:[%s2 + $0xa8] sm:$0xf] %vm466, %v380
  %510 = vst.msk [vmem:[%s2 + $0xac] sm:$0xf] %vm466, %v381
  %511 = vst.msk [vmem:[%s2 + $0xb0] sm:$0xf] %vm466, %v382
  %512 = vst.msk [vmem:[%s2 + $0xb4] sm:$0xf] %vm466, %v383
  %513 = vst.msk [vmem:[%s2 + $0xb8] sm:$0xf] %vm466, %v384
  %514 = vst.msk [vmem:[%s2 + $0xbc] sm:$0xf] %vm466, %v385
  %515 = vst.msk [vmem:[%s2 + $0xc0] sm:$0xf] %vm466, %v386
  %516 = vst.msk [vmem:[%s2 + $0xc4] sm:$0xf] %vm466, %v387
  %517 = vst.msk [vmem:[%s2 + $0xc8] sm:$0xf] %vm466, %v388
  %518 = vst.msk [vmem:[%s2 + $0xcc] sm:$0xf] %vm466, %v389
  %519 = vst.msk [vmem:[%s2 + $0xd0] sm:$0xf] %vm466, %v390
  %520 = vst.msk [vmem:[%s2 + $0xd4] sm:$0xf] %vm466, %v391
  %521 = vst.msk [vmem:[%s2 + $0xd8] sm:$0xf] %vm466, %v392
  %522 = vst.msk [vmem:[%s2 + $0xdc] sm:$0xf] %vm466, %v393
  %523 = vst.msk [vmem:[%s2 + $0xe0] sm:$0xf] %vm466, %v394
  %524 = vst.msk [vmem:[%s2 + $0xe4] sm:$0xf] %vm466, %v395
  %525 = vst.msk [vmem:[%s2 + $0xe8] sm:$0xf] %vm466, %v396
  %526 = vst.msk [vmem:[%s2 + $0xec] sm:$0xf] %vm466, %v397
  %527 = vst.msk [vmem:[%s2 + $0xf0] sm:$0xf] %vm466, %v398
  %528 = vst.msk [vmem:[%s2 + $0xf4] sm:$0xf] %vm466, %v399
  %529 = vst.msk [vmem:[%s2 + $0xf8] sm:$0xf] %vm466, %v400
  %530 = vst.msk [vmem:[%s2 + $0xfc] sm:$0xf] %vm466, %v401
  // Predicated region
  $region10: #{bias_act.1} parent=0 // pred_check
    _
  $region11: #{bias_act.1} parent=0 // pred_check_branch
    %532 = sbr.rel (0) target = $region13
  $region12: #{bias_act.1} parent=0 // pred_region
    _
  $region13: #{bias_act.1} parent=0 // pred_fallthru
    _
  // Predicated region
  $region14: #{bias_act.1} parent=0 // pred_check
    _
  $region15: #{bias_act.1} parent=0 // pred_check_branch
    %534 = sbr.rel (0) target = $region17
  $region16: #{bias_act.1} parent=0 // pred_region
    _
  $region17: #{bias_act.1} parent=0 // pred_fallthru
    _

</llo_original>
